<compile_context>
chip_gen: v5e
topology: v5e:2x2
jax: 0.10.0
libtpu: 0.0.40
codegen_flags: <defaults>
</compile_context>

<pallas_src>
import jax
import jax.numpy as jnp
from jax import lax
from jax.experimental import pallas as pl
from jax.experimental.pallas import tpu as pltpu

INPUT_SIZE = 28   # the undefined constant in the PyTorch snippet (MNIST-style)
HIDDEN = 64
OUT_FEATURES = 10
XPAD = 64         # x feature lanes padded to 64 so [x | h] packs into 128 lanes


def _lstm_fused_kernel(x_ref, w_ref, b_ref, wout_ref, bout_ref, out_ref):
    """Whole-sequence LSTM + final Linear in one kernel invocation.

    x_ref    : (T, B, XPAD)  time-major input, lanes I:XPAD zero-padded
    w_ref    : (XPAD+H, 4H)  fused [W_ih^T ; W_hh^T], gate columns [i,f,o,g]
    b_ref    : (1, 4H)       b_ih + b_hh, gate columns [i,f,o,g]
    wout_ref : (H, 10)       output Linear weight (transposed)
    bout_ref : (1, 10)       output Linear bias
    out_ref  : (B, 10)
    """
    T, B, _ = x_ref.shape
    H = wout_ref.shape[0]
    G = 4 * H

    # Loop-invariants hoisted out of the unrolled time loop.
    bias_full = jnp.broadcast_to(b_ref[...], (B, G))              # (B, 4H)
    lane = jax.lax.broadcasted_iota(jnp.int32, (B, G), 1)
    is_sigmoid = lane < 3 * H                                     # [i,f,o | g]

    def step(t, carry):
        h, c = carry
        x_t = x_ref[t]                                            # (B, XPAD)
        xh = jnp.concatenate([x_t, h], axis=1)                    # (B, XPAD+H)
        gates = jnp.dot(xh, w_ref[...],
                        preferred_element_type=jnp.float32) + bias_full
        # Full-width activations selected by lane mask (EUP slot is free here).
        act = jnp.where(is_sigmoid, jax.nn.sigmoid(gates), jnp.tanh(gates))
        i_g = act[:, 0 * H:1 * H]
        f_g = act[:, 1 * H:2 * H]
        o_g = act[:, 2 * H:3 * H]
        g_g = act[:, 3 * H:4 * H]
        c_new = f_g * c + i_g * g_g
        h_new = o_g * jnp.tanh(c_new)
        return (h_new, c_new)

    h0 = jnp.zeros((B, H), jnp.float32)
    c0 = jnp.zeros((B, H), jnp.float32)
    h_last, _ = lax.fori_loop(0, T, step, (h0, c0), unroll=True)

    out_ref[...] = (jnp.dot(h_last, wout_ref[...],
                            preferred_element_type=jnp.float32)
                    + jnp.broadcast_to(bout_ref[...], (B, out_ref.shape[-1])))


def _reorder_ifgo_to_ifog(w):
    """Permute the trailing 4H gate axis from PyTorch [i,f,g,o] to [i,f,o,g]."""
    i, f, g, o = jnp.split(w, 4, axis=-1)
    return jnp.concatenate([i, f, o, g], axis=-1)


def rnn_forward(x, params):
    """x: (B, T, INPUT_SIZE) float32, batch_first like PyTorch. Returns (B, 10)."""
    w_ih, w_hh, b_ih, b_hh, w_out, b_out = (
        params["w_ih"], params["w_hh"], params["b_ih"], params["b_hh"],
        params["w_out"], params["b_out"])
    B, T, I = x.shape
    H = w_hh.shape[1]
    assert I <= XPAD, "fused-weight packing assumes input_size <= 64"

    # Time-major, feature-padded input: lanes 0:I carry x, lanes I:XPAD are 0.
    x_tm = jnp.transpose(x, (1, 0, 2))                        # (T, B, I)
    x_pad = jnp.pad(x_tm, ((0, 0), (0, 0), (0, XPAD - I)))    # (T, B, XPAD)

    # Fused gate weight: rows 0:I multiply x, rows XPAD:XPAD+H multiply h.
    wih_t = _reorder_ifgo_to_ifog(jnp.transpose(w_ih))        # (I, 4H)
    whh_t = _reorder_ifgo_to_ifog(jnp.transpose(w_hh))        # (H, 4H)
    w_fused = jnp.zeros((XPAD + H, 4 * H), jnp.float32)
    w_fused = w_fused.at[:I, :].set(wih_t)
    w_fused = w_fused.at[XPAD:XPAD + H, :].set(whh_t)

    bias = _reorder_ifgo_to_ifog((b_ih + b_hh).reshape(1, 4 * H))   # (1, 4H)
    wout_t = jnp.transpose(w_out)                                   # (H, 10)
    bout = b_out.reshape(1, OUT_FEATURES)                           # (1, 10)

    vmem = pl.BlockSpec(memory_space=pltpu.MemorySpace.VMEM)
    return pl.pallas_call(
        _lstm_fused_kernel,
        out_shape=jax.ShapeDtypeStruct((B, OUT_FEATURES), jnp.float32),
        in_specs=[vmem, vmem, vmem, vmem, vmem],
        out_specs=pl.BlockSpec(memory_space=pltpu.MemorySpace.VMEM),
    )(x_pad, w_fused, bias, wout_t, bout)
    # TODO(synk): for large batches, add a batch grid axis marked "parallel"
    # (v7x megacore) and cast MXU operands to bf16; unnecessary at B=2.


def init_params(key):
    """Deterministic init mirroring PyTorch LSTM/Linear parameter shapes."""
    H, I = HIDDEN, INPUT_SIZE
    ks = jax.random.split(key, 6)
    bound_lstm = 1.0 / jnp.sqrt(H)
    bound_lin = 1.0 / jnp.sqrt(H)
    u = lambda k, shape, b: jax.random.uniform(k, shape, jnp.float32, -b, b)
    return {
        "w_ih": u(ks[0], (4 * H, I), bound_lstm),
        "w_hh": u(ks[1], (4 * H, H), bound_lstm),
        "b_ih": u(ks[2], (4 * H,), bound_lstm),
        "b_hh": u(ks[3], (4 * H,), bound_lstm),
        "w_out": u(ks[4], (OUT_FEATURES, H), bound_lin),
        "b_out": u(ks[5], (OUT_FEATURES,), bound_lin),
    }


def rnn_forward_ref(x, params):
    """Pure-JAX reference in PyTorch form (two dots, [i,f,g,o] gate order)."""
    H = HIDDEN
    wih_t = params["w_ih"].T
    whh_t = params["w_hh"].T
    bias = params["b_ih"] + params["b_hh"]
    B, T, _ = x.shape
    h = jnp.zeros((B, H), jnp.float32)
    c = jnp.zeros((B, H), jnp.float32)

    def step(carry, x_t):
        h, c = carry
        g = x_t @ wih_t + h @ whh_t + bias
        i = jax.nn.sigmoid(g[:, :H])
        f = jax.nn.sigmoid(g[:, H:2 * H])
        gg = jnp.tanh(g[:, 2 * H:3 * H])
        o = jax.nn.sigmoid(g[:, 3 * H:])
        c = f * c + i * gg
        h = o * jnp.tanh(c)
        return (h, c), None

    (h, c), _ = lax.scan(step, (h, c), jnp.transpose(x, (1, 0, 2)))
    return h @ params["w_out"].T + params["b_out"]


if __name__ == "__main__":
    key = jax.random.PRNGKey(0)
    k_param, k_x = jax.random.split(key)
    params = init_params(k_param)

    B, T = 2, 8
    x = jax.random.normal(k_x, (B, T, INPUT_SIZE), jnp.float32)

    out = rnn_forward(x, params)
    out = jax.block_until_ready(out)

    ref = rnn_forward_ref(x, params)
    assert out.shape == (B, OUT_FEATURES)
    # Tolerance allows for the fused-matmul accumulation order / default MXU
    # f32 precision differing from the reference's two-dot XLA form.
    assert jnp.allclose(out, ref, atol=2e-3, rtol=2e-3), "mismatch vs reference"

    print("KERNEL_OK")
</pallas_src>

<mosaic_0001>
module attributes {stable_mosaic.version = 11 : i64} {
  func.func @_lstm_fused_kernel(%arg0: memref<8x2x64xf32, #tpu.memory_space<vmem>>, %arg1: memref<128x256xf32, #tpu.memory_space<vmem>>, %arg2: memref<1x256xf32, #tpu.memory_space<vmem>>, %arg3: memref<64x10xf32, #tpu.memory_space<vmem>>, %arg4: memref<1x10xf32, #tpu.memory_space<vmem>>, %arg5: memref<2x10xf32, #tpu.memory_space<vmem>>) attributes {dimension_semantics = [], scalar_prefetch = 0 : i64, scratch_operands = 0 : i64, tpu.core_type = #tpu.core_type<tc>} {
    %c0 = arith.constant 0 : index
    %c0_0 = arith.constant 0 : index
    %0 = vector.load %arg2[%c0, %c0_0] : memref<1x256xf32, #tpu.memory_space<vmem>>, vector<1x256xf32>
    %1 = vector.shape_cast %0 : vector<1x256xf32> to vector<1x256xf32>
    %2 = vector.broadcast %1 : vector<1x256xf32> to vector<2x256xf32>
    %3 = tpu.iota {dimensions = array<i32: 1>} : vector<2x256xi32>
    %c192_i32 = arith.constant 192 : i32
    %4 = vector.broadcast %c192_i32 : i32 to vector<2x256xi32>
    %5 = arith.cmpi slt, %3, %4 : vector<2x256xi32>
    %cst = arith.constant 0.000000e+00 : f32
    %6 = vector.broadcast %cst : f32 to vector<2x64xf32>
    %cst_1 = arith.constant 0.000000e+00 : f32
    %7 = vector.broadcast %cst_1 : f32 to vector<2x64xf32>
    %c0_i32 = arith.constant 0 : i32
    %8 = arith.index_cast %c0_i32 : i32 to index
    %c0_2 = arith.constant 0 : index
    %c0_3 = arith.constant 0 : index
    %9 = vector.load %arg0[%8, %c0_2, %c0_3] : memref<8x2x64xf32, #tpu.memory_space<vmem>>, vector<1x2x64xf32>
    %10 = vector.shape_cast %9 : vector<1x2x64xf32> to vector<2x64xf32>
    %11 = tpu.concatenate %10, %6 in 1 : vector<2x64xf32>, vector<2x64xf32> -> vector<2x128xf32>
    %c0_4 = arith.constant 0 : index
    %c0_5 = arith.constant 0 : index
    %12 = vector.load %arg1[%c0_4, %c0_5] : memref<128x256xf32, #tpu.memory_space<vmem>>, vector<128x256xf32>
    %cst_6 = arith.constant dense<0.000000e+00> : vector<2x256xf32>
    %13 = tpu.matmul %11, %12, %cst_6 {dimension_numbers = #tpu.dot_dimension_numbers<[1], [0], [0], [1], [0, 0, 1, 1], [], []>} : vector<2x128xf32>, vector<128x256xf32>, vector<2x256xf32> -> vector<2x256xf32>
    %14 = arith.addf %13, %2 : vector<2x256xf32>
    %15 = arith.negf %14 : vector<2x256xf32>
    %16 = math.exp %15 : vector<2x256xf32>
    %cst_7 = arith.constant 1.000000e+00 : f32
    %17 = vector.broadcast %cst_7 : f32 to vector<2x256xf32>
    %18 = arith.addf %17, %16 : vector<2x256xf32>
    %19 = arith.divf %17, %18 : vector<2x256xf32>
    %20 = math.tanh %14 : vector<2x256xf32>
    %21 = arith.select %5, %19, %20 : vector<2x256xi1>, vector<2x256xf32>
    %22 = vector.extract_strided_slice %21 {offsets = [0, 0], sizes = [2, 64], strides = [1, 1]} : vector<2x256xf32> to vector<2x64xf32>
    %23 = vector.extract_strided_slice %21 {offsets = [0, 64], sizes = [2, 64], strides = [1, 1]} : vector<2x256xf32> to vector<2x64xf32>
    %24 = vector.extract_strided_slice %21 {offsets = [0, 128], sizes = [2, 64], strides = [1, 1]} : vector<2x256xf32> to vector<2x64xf32>
    %25 = vector.extract_strided_slice %21 {offsets = [0, 192], sizes = [2, 64], strides = [1, 1]} : vector<2x256xf32> to vector<2x64xf32>
    %26 = arith.mulf %23, %7 : vector<2x64xf32>
    %27 = arith.mulf %22, %25 : vector<2x64xf32>
    %28 = arith.addf %26, %27 : vector<2x64xf32>
    %29 = math.tanh %28 : vector<2x64xf32>
    %30 = arith.mulf %24, %29 : vector<2x64xf32>
    %c1_i32 = arith.constant 1 : i32
    %31 = arith.index_cast %c1_i32 : i32 to index
    %c0_8 = arith.constant 0 : index
    %c0_9 = arith.constant 0 : index
    %32 = vector.load %arg0[%31, %c0_8, %c0_9] : memref<8x2x64xf32, #tpu.memory_space<vmem>>, vector<1x2x64xf32>
    %33 = vector.shape_cast %32 : vector<1x2x64xf32> to vector<2x64xf32>
    %34 = tpu.concatenate %33, %30 in 1 : vector<2x64xf32>, vector<2x64xf32> -> vector<2x128xf32>
    %c0_10 = arith.constant 0 : index
    %c0_11 = arith.constant 0 : index
    %35 = vector.load %arg1[%c0_10, %c0_11] : memref<128x256xf32, #tpu.memory_space<vmem>>, vector<128x256xf32>
    %cst_12 = arith.constant dense<0.000000e+00> : vector<2x256xf32>
    %36 = tpu.matmul %34, %35, %cst_12 {dimension_numbers = #tpu.dot_dimension_numbers<[1], [0], [0], [1], [0, 0, 1, 1], [], []>} : vector<2x128xf32>, vector<128x256xf32>, vector<2x256xf32> -> vector<2x256xf32>
    %37 = arith.addf %36, %2 : vector<2x256xf32>
    %38 = arith.negf %37 : vector<2x256xf32>
    %39 = math.exp %38 : vector<2x256xf32>
    %cst_13 = arith.constant 1.000000e+00 : f32
    %40 = vector.broadcast %cst_13 : f32 to vector<2x256xf32>
    %41 = arith.addf %40, %39 : vector<2x256xf32>
    %42 = arith.divf %40, %41 : vector<2x256xf32>
    %43 = math.tanh %37 : vector<2x256xf32>
    %44 = arith.select %5, %42, %43 : vector<2x256xi1>, vector<2x256xf32>
    %45 = vector.extract_strided_slice %44 {offsets = [0, 0], sizes = [2, 64], strides = [1, 1]} : vector<2x256xf32> to vector<2x64xf32>
    %46 = vector.extract_strided_slice %44 {offsets = [0, 64], sizes = [2, 64], strides = [1, 1]} : vector<2x256xf32> to vector<2x64xf32>
    %47 = vector.extract_strided_slice %44 {offsets = [0, 128], sizes = [2, 64], strides = [1, 1]} : vector<2x256xf32> to vector<2x64xf32>
    %48 = vector.extract_strided_slice %44 {offsets = [0, 192], sizes = [2, 64], strides = [1, 1]} : vector<2x256xf32> to vector<2x64xf32>
    %49 = arith.mulf %46, %28 : vector<2x64xf32>
    %50 = arith.mulf %45, %48 : vector<2x64xf32>
    %51 = arith.addf %49, %50 : vector<2x64xf32>
    %52 = math.tanh %51 : vector<2x64xf32>
    %53 = arith.mulf %47, %52 : vector<2x64xf32>
    %c2_i32 = arith.constant 2 : i32
    %54 = arith.index_cast %c2_i32 : i32 to index
    %c0_14 = arith.constant 0 : index
    %c0_15 = arith.constant 0 : index
    %55 = vector.load %arg0[%54, %c0_14, %c0_15] : memref<8x2x64xf32, #tpu.memory_space<vmem>>, vector<1x2x64xf32>
    %56 = vector.shape_cast %55 : vector<1x2x64xf32> to vector<2x64xf32>
    %57 = tpu.concatenate %56, %53 in 1 : vector<2x64xf32>, vector<2x64xf32> -> vector<2x128xf32>
    %c0_16 = arith.constant 0 : index
    %c0_17 = arith.constant 0 : index
    %58 = vector.load %arg1[%c0_16, %c0_17] : memref<128x256xf32, #tpu.memory_space<vmem>>, vector<128x256xf32>
    %cst_18 = arith.constant dense<0.000000e+00> : vector<2x256xf32>
    %59 = tpu.matmul %57, %58, %cst_18 {dimension_numbers = #tpu.dot_dimension_numbers<[1], [0], [0], [1], [0, 0, 1, 1], [], []>} : vector<2x128xf32>, vector<128x256xf32>, vector<2x256xf32> -> vector<2x256xf32>
    %60 = arith.addf %59, %2 : vector<2x256xf32>
    %61 = arith.negf %60 : vector<2x256xf32>
    %62 = math.exp %61 : vector<2x256xf32>
    %cst_19 = arith.constant 1.000000e+00 : f32
    %63 = vector.broadcast %cst_19 : f32 to vector<2x256xf32>
    %64 = arith.addf %63, %62 : vector<2x256xf32>
    %65 = arith.divf %63, %64 : vector<2x256xf32>
    %66 = math.tanh %60 : vector<2x256xf32>
    %67 = arith.select %5, %65, %66 : vector<2x256xi1>, vector<2x256xf32>
    %68 = vector.extract_strided_slice %67 {offsets = [0, 0], sizes = [2, 64], strides = [1, 1]} : vector<2x256xf32> to vector<2x64xf32>
    %69 = vector.extract_strided_slice %67 {offsets = [0, 64], sizes = [2, 64], strides = [1, 1]} : vector<2x256xf32> to vector<2x64xf32>
    %70 = vector.extract_strided_slice %67 {offsets = [0, 128], sizes = [2, 64], strides = [1, 1]} : vector<2x256xf32> to vector<2x64xf32>
    %71 = vector.extract_strided_slice %67 {offsets = [0, 192], sizes = [2, 64], strides = [1, 1]} : vector<2x256xf32> to vector<2x64xf32>
    %72 = arith.mulf %69, %51 : vector<2x64xf32>
    %73 = arith.mulf %68, %71 : vector<2x64xf32>
    %74 = arith.addf %72, %73 : vector<2x64xf32>
    %75 = math.tanh %74 : vector<2x64xf32>
    %76 = arith.mulf %70, %75 : vector<2x64xf32>
    %c3_i32 = arith.constant 3 : i32
    %77 = arith.index_cast %c3_i32 : i32 to index
    %c0_20 = arith.constant 0 : index
    %c0_21 = arith.constant 0 : index
    %78 = vector.load %arg0[%77, %c0_20, %c0_21] : memref<8x2x64xf32, #tpu.memory_space<vmem>>, vector<1x2x64xf32>
    %79 = vector.shape_cast %78 : vector<1x2x64xf32> to vector<2x64xf32>
    %80 = tpu.concatenate %79, %76 in 1 : vector<2x64xf32>, vector<2x64xf32> -> vector<2x128xf32>
    %c0_22 = arith.constant 0 : index
    %c0_23 = arith.constant 0 : index
    %81 = vector.load %arg1[%c0_22, %c0_23] : memref<128x256xf32, #tpu.memory_space<vmem>>, vector<128x256xf32>
    %cst_24 = arith.constant dense<0.000000e+00> : vector<2x256xf32>
    %82 = tpu.matmul %80, %81, %cst_24 {dimension_numbers = #tpu.dot_dimension_numbers<[1], [0], [0], [1], [0, 0, 1, 1], [], []>} : vector<2x128xf32>, vector<128x256xf32>, vector<2x256xf32> -> vector<2x256xf32>
    %83 = arith.addf %82, %2 : vector<2x256xf32>
    %84 = arith.negf %83 : vector<2x256xf32>
    %85 = math.exp %84 : vector<2x256xf32>
    %cst_25 = arith.constant 1.000000e+00 : f32
    %86 = vector.broadcast %cst_25 : f32 to vector<2x256xf32>
    %87 = arith.addf %86, %85 : vector<2x256xf32>
    %88 = arith.divf %86, %87 : vector<2x256xf32>
    %89 = math.tanh %83 : vector<2x256xf32>
    %90 = arith.select %5, %88, %89 : vector<2x256xi1>, vector<2x256xf32>
    %91 = vector.extract_strided_slice %90 {offsets = [0, 0], sizes = [2, 64], strides = [1, 1]} : vector<2x256xf32> to vector<2x64xf32>
    %92 = vector.extract_strided_slice %90 {offsets = [0, 64], sizes = [2, 64], strides = [1, 1]} : vector<2x256xf32> to vector<2x64xf32>
    %93 = vector.extract_strided_slice %90 {offsets = [0, 128], sizes = [2, 64], strides = [1, 1]} : vector<2x256xf32> to vector<2x64xf32>
    %94 = vector.extract_strided_slice %90 {offsets = [0, 192], sizes = [2, 64], strides = [1, 1]} : vector<2x256xf32> to vector<2x64xf32>
    %95 = arith.mulf %92, %74 : vector<2x64xf32>
    %96 = arith.mulf %91, %94 : vector<2x64xf32>
    %97 = arith.addf %95, %96 : vector<2x64xf32>
    %98 = math.tanh %97 : vector<2x64xf32>
    %99 = arith.mulf %93, %98 : vector<2x64xf32>
    %c4_i32 = arith.constant 4 : i32
    %100 = arith.index_cast %c4_i32 : i32 to index
    %c0_26 = arith.constant 0 : index
    %c0_27 = arith.constant 0 : index
    %101 = vector.load %arg0[%100, %c0_26, %c0_27] : memref<8x2x64xf32, #tpu.memory_space<vmem>>, vector<1x2x64xf32>
    %102 = vector.shape_cast %101 : vector<1x2x64xf32> to vector<2x64xf32>
    %103 = tpu.concatenate %102, %99 in 1 : vector<2x64xf32>, vector<2x64xf32> -> vector<2x128xf32>
    %c0_28 = arith.constant 0 : index
    %c0_29 = arith.constant 0 : index
    %104 = vector.load %arg1[%c0_28, %c0_29] : memref<128x256xf32, #tpu.memory_space<vmem>>, vector<128x256xf32>
    %cst_30 = arith.constant dense<0.000000e+00> : vector<2x256xf32>
    %105 = tpu.matmul %103, %104, %cst_30 {dimension_numbers = #tpu.dot_dimension_numbers<[1], [0], [0], [1], [0, 0, 1, 1], [], []>} : vector<2x128xf32>, vector<128x256xf32>, vector<2x256xf32> -> vector<2x256xf32>
    %106 = arith.addf %105, %2 : vector<2x256xf32>
    %107 = arith.negf %106 : vector<2x256xf32>
    %108 = math.exp %107 : vector<2x256xf32>
    %cst_31 = arith.constant 1.000000e+00 : f32
    %109 = vector.broadcast %cst_31 : f32 to vector<2x256xf32>
    %110 = arith.addf %109, %108 : vector<2x256xf32>
    %111 = arith.divf %109, %110 : vector<2x256xf32>
    %112 = math.tanh %106 : vector<2x256xf32>
    %113 = arith.select %5, %111, %112 : vector<2x256xi1>, vector<2x256xf32>
    %114 = vector.extract_strided_slice %113 {offsets = [0, 0], sizes = [2, 64], strides = [1, 1]} : vector<2x256xf32> to vector<2x64xf32>
    %115 = vector.extract_strided_slice %113 {offsets = [0, 64], sizes = [2, 64], strides = [1, 1]} : vector<2x256xf32> to vector<2x64xf32>
    %116 = vector.extract_strided_slice %113 {offsets = [0, 128], sizes = [2, 64], strides = [1, 1]} : vector<2x256xf32> to vector<2x64xf32>
    %117 = vector.extract_strided_slice %113 {offsets = [0, 192], sizes = [2, 64], strides = [1, 1]} : vector<2x256xf32> to vector<2x64xf32>
    %118 = arith.mulf %115, %97 : vector<2x64xf32>
    %119 = arith.mulf %114, %117 : vector<2x64xf32>
    %120 = arith.addf %118, %119 : vector<2x64xf32>
    %121 = math.tanh %120 : vector<2x64xf32>
    %122 = arith.mulf %116, %121 : vector<2x64xf32>
    %c5_i32 = arith.constant 5 : i32
    %123 = arith.index_cast %c5_i32 : i32 to index
    %c0_32 = arith.constant 0 : index
    %c0_33 = arith.constant 0 : index
    %124 = vector.load %arg0[%123, %c0_32, %c0_33] : memref<8x2x64xf32, #tpu.memory_space<vmem>>, vector<1x2x64xf32>
    %125 = vector.shape_cast %124 : vector<1x2x64xf32> to vector<2x64xf32>
    %126 = tpu.concatenate %125, %122 in 1 : vector<2x64xf32>, vector<2x64xf32> -> vector<2x128xf32>
    %c0_34 = arith.constant 0 : index
    %c0_35 = arith.constant 0 : index
    %127 = vector.load %arg1[%c0_34, %c0_35] : memref<128x256xf32, #tpu.memory_space<vmem>>, vector<128x256xf32>
    %cst_36 = arith.constant dense<0.000000e+00> : vector<2x256xf32>
    %128 = tpu.matmul %126, %127, %cst_36 {dimension_numbers = #tpu.dot_dimension_numbers<[1], [0], [0], [1], [0, 0, 1, 1], [], []>} : vector<2x128xf32>, vector<128x256xf32>, vector<2x256xf32> -> vector<2x256xf32>
    %129 = arith.addf %128, %2 : vector<2x256xf32>
    %130 = arith.negf %129 : vector<2x256xf32>
    %131 = math.exp %130 : vector<2x256xf32>
    %cst_37 = arith.constant 1.000000e+00 : f32
    %132 = vector.broadcast %cst_37 : f32 to vector<2x256xf32>
    %133 = arith.addf %132, %131 : vector<2x256xf32>
    %134 = arith.divf %132, %133 : vector<2x256xf32>
    %135 = math.tanh %129 : vector<2x256xf32>
    %136 = arith.select %5, %134, %135 : vector<2x256xi1>, vector<2x256xf32>
    %137 = vector.extract_strided_slice %136 {offsets = [0, 0], sizes = [2, 64], strides = [1, 1]} : vector<2x256xf32> to vector<2x64xf32>
    %138 = vector.extract_strided_slice %136 {offsets = [0, 64], sizes = [2, 64], strides = [1, 1]} : vector<2x256xf32> to vector<2x64xf32>
    %139 = vector.extract_strided_slice %136 {offsets = [0, 128], sizes = [2, 64], strides = [1, 1]} : vector<2x256xf32> to vector<2x64xf32>
    %140 = vector.extract_strided_slice %136 {offsets = [0, 192], sizes = [2, 64], strides = [1, 1]} : vector<2x256xf32> to vector<2x64xf32>
    %141 = arith.mulf %138, %120 : vector<2x64xf32>
    %142 = arith.mulf %137, %140 : vector<2x64xf32>
    %143 = arith.addf %141, %142 : vector<2x64xf32>
    %144 = math.tanh %143 : vector<2x64xf32>
    %145 = arith.mulf %139, %144 : vector<2x64xf32>
    %c6_i32 = arith.constant 6 : i32
    %146 = arith.index_cast %c6_i32 : i32 to index
    %c0_38 = arith.constant 0 : index
    %c0_39 = arith.constant 0 : index
    %147 = vector.load %arg0[%146, %c0_38, %c0_39] : memref<8x2x64xf32, #tpu.memory_space<vmem>>, vector<1x2x64xf32>
    %148 = vector.shape_cast %147 : vector<1x2x64xf32> to vector<2x64xf32>
    %149 = tpu.concatenate %148, %145 in 1 : vector<2x64xf32>, vector<2x64xf32> -> vector<2x128xf32>
    %c0_40 = arith.constant 0 : index
    %c0_41 = arith.constant 0 : index
    %150 = vector.load %arg1[%c0_40, %c0_41] : memref<128x256xf32, #tpu.memory_space<vmem>>, vector<128x256xf32>
    %cst_42 = arith.constant dense<0.000000e+00> : vector<2x256xf32>
    %151 = tpu.matmul %149, %150, %cst_42 {dimension_numbers = #tpu.dot_dimension_numbers<[1], [0], [0], [1], [0, 0, 1, 1], [], []>} : vector<2x128xf32>, vector<128x256xf32>, vector<2x256xf32> -> vector<2x256xf32>
    %152 = arith.addf %151, %2 : vector<2x256xf32>
    %153 = arith.negf %152 : vector<2x256xf32>
    %154 = math.exp %153 : vector<2x256xf32>
    %cst_43 = arith.constant 1.000000e+00 : f32
    %155 = vector.broadcast %cst_43 : f32 to vector<2x256xf32>
    %156 = arith.addf %155, %154 : vector<2x256xf32>
    %157 = arith.divf %155, %156 : vector<2x256xf32>
    %158 = math.tanh %152 : vector<2x256xf32>
    %159 = arith.select %5, %157, %158 : vector<2x256xi1>, vector<2x256xf32>
    %160 = vector.extract_strided_slice %159 {offsets = [0, 0], sizes = [2, 64], strides = [1, 1]} : vector<2x256xf32> to vector<2x64xf32>
    %161 = vector.extract_strided_slice %159 {offsets = [0, 64], sizes = [2, 64], strides = [1, 1]} : vector<2x256xf32> to vector<2x64xf32>
    %162 = vector.extract_strided_slice %159 {offsets = [0, 128], sizes = [2, 64], strides = [1, 1]} : vector<2x256xf32> to vector<2x64xf32>
    %163 = vector.extract_strided_slice %159 {offsets = [0, 192], sizes = [2, 64], strides = [1, 1]} : vector<2x256xf32> to vector<2x64xf32>
    %164 = arith.mulf %161, %143 : vector<2x64xf32>
    %165 = arith.mulf %160, %163 : vector<2x64xf32>
    %166 = arith.addf %164, %165 : vector<2x64xf32>
    %167 = math.tanh %166 : vector<2x64xf32>
    %168 = arith.mulf %162, %167 : vector<2x64xf32>
    %c7_i32 = arith.constant 7 : i32
    %169 = arith.index_cast %c7_i32 : i32 to index
    %c0_44 = arith.constant 0 : index
    %c0_45 = arith.constant 0 : index
    %170 = vector.load %arg0[%169, %c0_44, %c0_45] : memref<8x2x64xf32, #tpu.memory_space<vmem>>, vector<1x2x64xf32>
    %171 = vector.shape_cast %170 : vector<1x2x64xf32> to vector<2x64xf32>
    %172 = tpu.concatenate %171, %168 in 1 : vector<2x64xf32>, vector<2x64xf32> -> vector<2x128xf32>
    %c0_46 = arith.constant 0 : index
    %c0_47 = arith.constant 0 : index
    %173 = vector.load %arg1[%c0_46, %c0_47] : memref<128x256xf32, #tpu.memory_space<vmem>>, vector<128x256xf32>
    %cst_48 = arith.constant dense<0.000000e+00> : vector<2x256xf32>
    %174 = tpu.matmul %172, %173, %cst_48 {dimension_numbers = #tpu.dot_dimension_numbers<[1], [0], [0], [1], [0, 0, 1, 1], [], []>} : vector<2x128xf32>, vector<128x256xf32>, vector<2x256xf32> -> vector<2x256xf32>
    %175 = arith.addf %174, %2 : vector<2x256xf32>
    %176 = arith.negf %175 : vector<2x256xf32>
    %177 = math.exp %176 : vector<2x256xf32>
    %cst_49 = arith.constant 1.000000e+00 : f32
    %178 = vector.broadcast %cst_49 : f32 to vector<2x256xf32>
    %179 = arith.addf %178, %177 : vector<2x256xf32>
    %180 = arith.divf %178, %179 : vector<2x256xf32>
    %181 = math.tanh %175 : vector<2x256xf32>
    %182 = arith.select %5, %180, %181 : vector<2x256xi1>, vector<2x256xf32>
    %183 = vector.extract_strided_slice %182 {offsets = [0, 0], sizes = [2, 64], strides = [1, 1]} : vector<2x256xf32> to vector<2x64xf32>
    %184 = vector.extract_strided_slice %182 {offsets = [0, 64], sizes = [2, 64], strides = [1, 1]} : vector<2x256xf32> to vector<2x64xf32>
    %185 = vector.extract_strided_slice %182 {offsets = [0, 128], sizes = [2, 64], strides = [1, 1]} : vector<2x256xf32> to vector<2x64xf32>
    %186 = vector.extract_strided_slice %182 {offsets = [0, 192], sizes = [2, 64], strides = [1, 1]} : vector<2x256xf32> to vector<2x64xf32>
    %187 = arith.mulf %184, %166 : vector<2x64xf32>
    %188 = arith.mulf %183, %186 : vector<2x64xf32>
    %189 = arith.addf %187, %188 : vector<2x64xf32>
    %190 = math.tanh %189 : vector<2x64xf32>
    %191 = arith.mulf %185, %190 : vector<2x64xf32>
    %c8_i32 = arith.constant 8 : i32
    %c0_50 = arith.constant 0 : index
    %c0_51 = arith.constant 0 : index
    %192 = vector.load %arg3[%c0_50, %c0_51] : memref<64x10xf32, #tpu.memory_space<vmem>>, vector<64x10xf32>
    %cst_52 = arith.constant dense<0.000000e+00> : vector<2x10xf32>
    %193 = tpu.matmul %191, %192, %cst_52 {dimension_numbers = #tpu.dot_dimension_numbers<[1], [0], [0], [1], [0, 0, 1, 1], [], []>} : vector<2x64xf32>, vector<64x10xf32>, vector<2x10xf32> -> vector<2x10xf32>
    %c0_53 = arith.constant 0 : index
    %c0_54 = arith.constant 0 : index
    %194 = vector.load %arg4[%c0_53, %c0_54] : memref<1x10xf32, #tpu.memory_space<vmem>>, vector<1x10xf32>
    %195 = vector.shape_cast %194 : vector<1x10xf32> to vector<1x10xf32>
    %196 = vector.broadcast %195 : vector<1x10xf32> to vector<2x10xf32>
    %197 = arith.addf %193, %196 : vector<2x10xf32>
    %c0_55 = arith.constant 0 : index
    %c0_56 = arith.constant 0 : index
    %198 = vector.load %arg5[%c0_55, %c0_56] : memref<2x10xf32, #tpu.memory_space<vmem>>, vector<2x10xf32>
    tpu.vector_store %arg5[%c0_55, %c0_56], %197 {strides = array<i32>} : memref<2x10xf32, #tpu.memory_space<vmem>>, vector<2x10xf32>,
    return
  }
}

</mosaic_0001>

<llo_original>
// kernel: tpu_custom_call.1
$region0: #{tpu_custom_call.1}
  #allocation0 [shape = 'u32[]', space=smem, size = 0x4, offset = 0x4, fixed_abs, tag = 'smem constant byte address 0x4 - core index']
  #allocation1 [shape = 'u32[72,128]{1,0:T(1,128)}', space=vmem, size = 0x9000, scoped, tag = 'internal scratch']
  %s0 = inlined_call_operand.vmem [shape: f32[8,2,64], index: 0, kind: input, shape index: {}]
  %s1 = inlined_call_operand.hbm [shape: f32[128,256], index: 1, kind: input, shape index: {}]
  %s2 = inlined_call_operand.vmem [shape: f32[1,256], index: 2, kind: input, shape index: {}]
  %s3 = inlined_call_operand.vmem [shape: f32[64,10], index: 3, kind: input, shape index: {}]
  %s4 = inlined_call_operand.vmem [shape: f32[1,10], index: 4, kind: input, shape index: {}]
  %s5 = inlined_call_operand.hbm [shape: f32[2,10], index: 5, kind: output, shape index: {}]
  %s6 = sld [smem:[#allocation0]]
  $region34: #{tpu_custom_call.1} parent=0
    _
  %s8 = ssub.s32 1, %s6
  %s9 = scalar_select 0, %s8, %s6
  $region1: #{tpu_custom_call.1} parent=0
    #allocation2 [shape = 'u8[131072]{0}', space=vmem, size = 0x20000, scoped, tag = 'input window, operand 1, single buffered']
    #allocation3 [shape = 's32[1]{0}', space=sflag, size = 0x4, scoped, tag = 'scoped memory for tpu_custom_call.1']
    #allocation4 [shape = 's32[1]{0}', space=sflag, size = 0x4, scoped, tag = 'scoped memory for tpu_custom_call.1']
    #allocation5 [shape = 'u8[1024]{0}', space=vmem, size = 0x400, scoped, tag = 'output window, operand 0, single buffered']
    %10 = vsyncpa [#allocation3], 0
    %11 = vsyncpa [#allocation4], 0
    // Predicated region
    $region2: #{tpu_custom_call.1} parent=1 // pred_check
      _
    $region3: #{tpu_custom_call.1} parent=1 // pred_check_branch
      %13 = sbr.rel (0) target = $region5
    $region4: #{tpu_custom_call.1} parent=1 // pred_region
      _
    $region5: #{tpu_custom_call.1} parent=1 // pred_fallthru
      _
    // Predicated region
    $region6: #{tpu_custom_call.1} parent=1 // pred_check
      _
    $region7: #{tpu_custom_call.1} parent=1 // pred_check_branch
      %15 = sbr.rel (0) target = $region9
    $region8: #{tpu_custom_call.1} parent=1 // pred_region
      %17 = vsyncadd [#allocation3], 0
      %s18 = sshll.u32 %s1, 4
      %s19 = int_to_ptr.hbm [resolvable:$true] %s18
      %s20 = sshll.u32 [#allocation2], 4
      %s21 = int_to_ptr.vmem [resolvable:$true] %s20
      %26 = dma.hbm_to_vmem [thread:$0]  %s19, 4096, %s21, [#allocation3], 256, 256, 16
    $region9: #{tpu_custom_call.1} parent=1 // pred_fallthru
      _
    // Predicated region
    $region10: #{tpu_custom_call.1} parent=1 // pred_check
      _
    $region11: #{tpu_custom_call.1} parent=1 // pred_check_branch
      %28 = sbr.rel (0) target = $region13
    $region12: #{tpu_custom_call.1} parent=1 // pred_region
      _
    $region13: #{tpu_custom_call.1} parent=1 // pred_fallthru
      _
    // Predicated region
    $region14: #{tpu_custom_call.1} parent=1 // pred_check
      _
    $region15: #{tpu_custom_call.1} parent=1 // pred_check_branch
      %30 = sbr.rel (0) target = $region17
    $region16: #{tpu_custom_call.1} parent=1 // pred_region
      _
    $region17: #{tpu_custom_call.1} parent=1 // pred_fallthru
      _
    // Predicated region
    $region18: #{tpu_custom_call.1} parent=1 // pred_check
      _
    $region19: #{tpu_custom_call.1} parent=1 // pred_check_branch
      %32 = sbr.rel (0) target = $region21
    $region20: #{tpu_custom_call.1} parent=1 // pred_region
      _
    $region21: #{tpu_custom_call.1} parent=1 // pred_fallthru
      _
    // Predicated region
    $region22: #{tpu_custom_call.1} parent=1 // pred_check
      _
    $region23: #{tpu_custom_call.1} parent=1 // pred_check_branch
      %34 = sbr.rel (0) target = $region25
    $region24: #{tpu_custom_call.1} parent=1 // pred_region
      %36 = dma.done [#allocation3], 4096
    $region25: #{tpu_custom_call.1} parent=1 // pred_fallthru
      _
    %v37 = vld [vmem:[%s2] sm:$0x3]
    %v39 = vperm.slane %v37, 0
    %v40 = vperm.slane %v37, 1
    %v43 = vlaneseq
    %v44 = vand.u32 %v43, 127
    %v45 = vadd.s32 %v44, 128
    %vm46 = vcmp.lt.s32.totalorder %v44, 192
    %vm47 = vcmp.lt.s32.totalorder %v45, 192
    %v48 = vld [vmem:[%s0] sm:$0x3]
    %vm49 = vcmask 523264
    %v50 = vsel %vm49, %v48, 0.0
    %v51 = vld [vmem:[#allocation2] sm:$0xff]
    %v52 = vld [vmem:[#allocation2 + $0x8] sm:$0xff]
    %v53 = vld [vmem:[#allocation2 + $0x10] sm:$0xff]
    %v54 = vld [vmem:[#allocation2 + $0x18] sm:$0xff]
    %v55 = vld [vmem:[#allocation2 + $0x20] sm:$0xff]
    %v56 = vld [vmem:[#allocation2 + $0x28] sm:$0xff]
    %v57 = vld [vmem:[#allocation2 + $0x30] sm:$0xff]
    %v58 = vld [vmem:[#allocation2 + $0x38] sm:$0xff]
    %v59 = vld [vmem:[#allocation2 + $0x40] sm:$0xff]
    %v60 = vld [vmem:[#allocation2 + $0x48] sm:$0xff]
    %v61 = vld [vmem:[#allocation2 + $0x50] sm:$0xff]
    %v62 = vld [vmem:[#allocation2 + $0x58] sm:$0xff]
    %v63 = vld [vmem:[#allocation2 + $0x60] sm:$0xff]
    %v64 = vld [vmem:[#allocation2 + $0x68] sm:$0xff]
    %v65 = vld [vmem:[#allocation2 + $0x70] sm:$0xff]
    %v66 = vld [vmem:[#allocation2 + $0x78] sm:$0xff]
    %v67 = vld [vmem:[#allocation2 + $0x80] sm:$0xff]
    %v68 = vld [vmem:[#allocation2 + $0x88] sm:$0xff]
    %v69 = vld [vmem:[#allocation2 + $0x90] sm:$0xff]
    %v70 = vld [vmem:[#allocation2 + $0x98] sm:$0xff]
    %v71 = vld [vmem:[#allocation2 + $0xa0] sm:$0xff]
    %v72 = vld [vmem:[#allocation2 + $0xa8] sm:$0xff]
    %v73 = vld [vmem:[#allocation2 + $0xb0] sm:$0xff]
    %v74 = vld [vmem:[#allocation2 + $0xb8] sm:$0xff]
    %v75 = vld [vmem:[#allocation2 + $0xc0] sm:$0xff]
    %v76 = vld [vmem:[#allocation2 + $0xc8] sm:$0xff]
    %v77 = vld [vmem:[#allocation2 + $0xd0] sm:$0xff]
    %v78 = vld [vmem:[#allocation2 + $0xd8] sm:$0xff]
    %v79 = vld [vmem:[#allocation2 + $0xe0] sm:$0xff]
    %v80 = vld [vmem:[#allocation2 + $0xe8] sm:$0xff]
    %v81 = vld [vmem:[#allocation2 + $0xf0] sm:$0xff]
    %v82 = vld [vmem:[#allocation2 + $0xf8] sm:$0xff]
    %83 = vmatpush.msra.mxu0 %v81
    %84 = vmatpush.msra.mxu0 %v79
    %85 = vmatpush.msra.mxu0 %v77
    %86 = vmatpush.msra.mxu0 %v75
    %87 = vmatpush.msra.mxu0 %v73
    %88 = vmatpush.msra.mxu0 %v71
    %89 = vmatpush.msra.mxu0 %v69
    %90 = vmatpush.msra.mxu0 %v67
    %91 = vmatpush.msra.mxu0 %v65
    %92 = vmatpush.msra.mxu0 %v63
    %93 = vmatpush.msra.mxu0 %v61
    %94 = vmatpush.msra.mxu0 %v59
    %95 = vmatpush.msra.mxu0 %v57
    %96 = vmatpush.msra.mxu0 %v55
    %97 = vmatpush.msra.mxu0 %v53
    %98 = vmatpush.msra.mxu0 %v51
    %99 = vmatmul.f32.gmra.mxu0 %v50
    %v100 = vpop.f32.mrf.mxu0
    %v101 = vadd.f32 %v39, %v100
    %102 = vdwg.mxu0
    %103 = vmatpush.msra.mxu0 %v82
    %104 = vmatpush.msra.mxu0 %v80
    %105 = vmatpush.msra.mxu0 %v78
    %106 = vmatpush.msra.mxu0 %v76
    %107 = vmatpush.msra.mxu0 %v74
    %108 = vmatpush.msra.mxu0 %v72
    %109 = vmatpush.msra.mxu0 %v70
    %110 = vmatpush.msra.mxu0 %v68
    %111 = vmatpush.msra.mxu0 %v66
    %112 = vmatpush.msra.mxu0 %v64
    %113 = vmatpush.msra.mxu0 %v62
    %114 = vmatpush.msra.mxu0 %v60
    %115 = vmatpush.msra.mxu0 %v58
    %116 = vmatpush.msra.mxu0 %v56
    %117 = vmatpush.msra.mxu0 %v54
    %118 = vmatpush.msra.mxu0 %v52
    %119 = vmatmul.f32.gmra.mxu0 %v50
    %v120 = vpop.f32.mrf.mxu0
    %v121 = vadd.f32 %v40, %v120
    %122 = vdwg.mxu0
    %v123 = vxor.u32 %v101, 2147483648
    %v124 = vxor.u32 %v121, 2147483648
    %v125 = vmul.f32 %v123, 1.442695
    %v126 = vpow.pop %v125
    %v127 = vmul.f32 %v124, 1.442695
    %v128 = vpow.pop %v127
    %v129 = vadd.f32 %v126, 1.0
    %v130 = vadd.f32 %v128, 1.0
    %v131 = vrcp.pop %v129
    %v132 = vmul.f32 %v129, %v131
    %v133 = vsub.f32 1.0, %v132
    %v134 = vmul.f32 %v131, %v133
    %v135 = vadd.f32 %v131, %v134
    %vm136 = vweird.f32 %v129
    %vm137 = vweird.f32 %v131
    %vm138 = vmor %vm136, %vm137
    %v139 = vsel %vm138, %v131, %v135
    %v140 = vand.u32 2147483647, %v129
    %vm141 = vcmp.eq.f32.partialorder %v140, 8.507059e+37
    %v142 = vand.u32 %v129, 2147483648
    %v143 = vor.u32 1.1754944e-38, %v142
    %v144 = vsel %vm141, %v143, %v139
    %v145 = vmul.f32 1.0, %v144
    %v146 = vrcp.pop %v130
    %v147 = vmul.f32 %v130, %v146
    %v148 = vsub.f32 1.0, %v147
    %v149 = vmul.f32 %v146, %v148
    %v150 = vadd.f32 %v146, %v149
    %vm151 = vweird.f32 %v130
    %vm152 = vweird.f32 %v146
    %vm153 = vmor %vm151, %vm152
    %v154 = vsel %vm153, %v146, %v150
    %v155 = vand.u32 2147483647, %v130
    %vm156 = vcmp.eq.f32.partialorder %v155, 8.507059e+37
    %v157 = vand.u32 %v130, 2147483648
    %v158 = vor.u32 1.1754944e-38, %v157
    %v159 = vsel %vm156, %v158, %v154
    %v160 = vmul.f32 1.0, %v159
    %v161 = vtanh.pop %v101
    %v162 = vtanh.pop %v121
    %v163 = vsel %vm46, %v145, %v161
    %v164 = vsel %vm47, %v160, %v162
    %v165 = vmul.f32 %v163, 0.0
    %167 = vrot.lane.b32.xlu0 %v164, 64
    %v168 = vpop.permute.xlu0 %167
    %v170 = vmul.f32 %v163, %v168
    %172 = vrot.lane.b32.xlu0 %v170, 64
    %v173 = vpop.permute.xlu0 %172
    %v175 = vadd.f32 %v165, %v173
    %v176 = vtanh.pop %v175
    %178 = vrot.lane.b32.xlu0 %v176, 64
    %v179 = vpop.permute.xlu0 %178
    %v181 = vmul.f32 %v164, %v179
    %s182 = scalar_lea.vmem %s0, 2
    %v183 = vld [vmem:[%s182] sm:$0x3]
    %185 = vrot.lane.b32.xlu0 %v181, 64
    %v186 = vpop.permute.xlu0 %185
    %v188 = vsel %vm49, %v183, %v186
    %189 = vmatpush.msra.mxu0 %v81
    %190 = vmatpush.msra.mxu0 %v79
    %191 = vmatpush.msra.mxu0 %v77
    %192 = vmatpush.msra.mxu0 %v75
    %193 = vmatpush.msra.mxu0 %v73
    %194 = vmatpush.msra.mxu0 %v71
    %195 = vmatpush.msra.mxu0 %v69
    %196 = vmatpush.msra.mxu0 %v67
    %197 = vmatpush.msra.mxu0 %v65
    %198 = vmatpush.msra.mxu0 %v63
    %199 = vmatpush.msra.mxu0 %v61
    %200 = vmatpush.msra.mxu0 %v59
    %201 = vmatpush.msra.mxu0 %v57
    %202 = vmatpush.msra.mxu0 %v55
    %203 = vmatpush.msra.mxu0 %v53
    %204 = vmatpush.msra.mxu0 %v51
    %205 = vmatmul.f32.gmra.mxu0 %v188
    %v206 = vpop.f32.mrf.mxu0
    %v207 = vadd.f32 %v39, %v206
    %208 = vdwg.mxu0
    %209 = vmatpush.msra.mxu0 %v82
    %210 = vmatpush.msra.mxu0 %v80
    %211 = vmatpush.msra.mxu0 %v78
    %212 = vmatpush.msra.mxu0 %v76
    %213 = vmatpush.msra.mxu0 %v74
    %214 = vmatpush.msra.mxu0 %v72
    %215 = vmatpush.msra.mxu0 %v70
    %216 = vmatpush.msra.mxu0 %v68
    %217 = vmatpush.msra.mxu0 %v66
    %218 = vmatpush.msra.mxu0 %v64
    %219 = vmatpush.msra.mxu0 %v62
    %220 = vmatpush.msra.mxu0 %v60
    %221 = vmatpush.msra.mxu0 %v58
    %222 = vmatpush.msra.mxu0 %v56
    %223 = vmatpush.msra.mxu0 %v54
    %224 = vmatpush.msra.mxu0 %v52
    %225 = vmatmul.f32.gmra.mxu0 %v188
    %v226 = vpop.f32.mrf.mxu0
    %v227 = vadd.f32 %v40, %v226
    %228 = vdwg.mxu0
    %v229 = vxor.u32 %v207, 2147483648
    %v230 = vxor.u32 %v227, 2147483648
    %v231 = vmul.f32 %v229, 1.442695
    %v232 = vpow.pop %v231
    %v233 = vmul.f32 %v230, 1.442695
    %v234 = vpow.pop %v233
    %v235 = vadd.f32 %v232, 1.0
    %v236 = vadd.f32 %v234, 1.0
    %v237 = vrcp.pop %v235
    %v238 = vmul.f32 %v235, %v237
    %v239 = vsub.f32 1.0, %v238
    %v240 = vmul.f32 %v237, %v239
    %v241 = vadd.f32 %v237, %v240
    %vm242 = vweird.f32 %v235
    %vm243 = vweird.f32 %v237
    %vm244 = vmor %vm242, %vm243
    %v245 = vsel %vm244, %v237, %v241
    %v246 = vand.u32 2147483647, %v235
    %vm247 = vcmp.eq.f32.partialorder %v246, 8.507059e+37
    %v248 = vand.u32 %v235, 2147483648
    %v249 = vor.u32 1.1754944e-38, %v248
    %v250 = vsel %vm247, %v249, %v245
    %v251 = vmul.f32 1.0, %v250
    %v252 = vrcp.pop %v236
    %v253 = vmul.f32 %v236, %v252
    %v254 = vsub.f32 1.0, %v253
    %v255 = vmul.f32 %v252, %v254
    %v256 = vadd.f32 %v252, %v255
    %vm257 = vweird.f32 %v236
    %vm258 = vweird.f32 %v252
    %vm259 = vmor %vm257, %vm258
    %v260 = vsel %vm259, %v252, %v256
    %v261 = vand.u32 2147483647, %v236
    %vm262 = vcmp.eq.f32.partialorder %v261, 8.507059e+37
    %v263 = vand.u32 %v236, 2147483648
    %v264 = vor.u32 1.1754944e-38, %v263
    %v265 = vsel %vm262, %v264, %v260
    %v266 = vmul.f32 1.0, %v265
    %v267 = vtanh.pop %v207
    %v268 = vtanh.pop %v227
    %v269 = vsel %vm46, %v251, %v267
    %v270 = vsel %vm47, %v266, %v268
    %v271 = vmul.f32 %v269, %v175
    %273 = vrot.lane.b32.xlu0 %v270, 64
    %v274 = vpop.permute.xlu0 %273
    %v276 = vmul.f32 %v269, %v274
    %278 = vrot.lane.b32.xlu0 %v276, 64
    %v279 = vpop.permute.xlu0 %278
    %v281 = vadd.f32 %v271, %v279
    %v282 = vtanh.pop %v281
    %284 = vrot.lane.b32.xlu0 %v282, 64
    %v285 = vpop.permute.xlu0 %284
    %v287 = vmul.f32 %v270, %v285
    %s288 = scalar_lea.vmem %s0, 4
    %v289 = vld [vmem:[%s288] sm:$0x3]
    %291 = vrot.lane.b32.xlu0 %v287, 64
    %v292 = vpop.permute.xlu0 %291
    %v294 = vsel %vm49, %v289, %v292
    %295 = vmatpush.msra.mxu0 %v81
    %296 = vmatpush.msra.mxu0 %v79
    %297 = vmatpush.msra.mxu0 %v77
    %298 = vmatpush.msra.mxu0 %v75
    %299 = vmatpush.msra.mxu0 %v73
    %300 = vmatpush.msra.mxu0 %v71
    %301 = vmatpush.msra.mxu0 %v69
    %302 = vmatpush.msra.mxu0 %v67
    %303 = vmatpush.msra.mxu0 %v65
    %304 = vmatpush.msra.mxu0 %v63
    %305 = vmatpush.msra.mxu0 %v61
    %306 = vmatpush.msra.mxu0 %v59
    %307 = vmatpush.msra.mxu0 %v57
    %308 = vmatpush.msra.mxu0 %v55
    %309 = vmatpush.msra.mxu0 %v53
    %310 = vmatpush.msra.mxu0 %v51
    %311 = vmatmul.f32.gmra.mxu0 %v294
    %v312 = vpop.f32.mrf.mxu0
    %v313 = vadd.f32 %v39, %v312
    %314 = vdwg.mxu0
    %315 = vmatpush.msra.mxu0 %v82
    %316 = vmatpush.msra.mxu0 %v80
    %317 = vmatpush.msra.mxu0 %v78
    %318 = vmatpush.msra.mxu0 %v76
    %319 = vmatpush.msra.mxu0 %v74
    %320 = vmatpush.msra.mxu0 %v72
    %321 = vmatpush.msra.mxu0 %v70
    %322 = vmatpush.msra.mxu0 %v68
    %323 = vmatpush.msra.mxu0 %v66
    %324 = vmatpush.msra.mxu0 %v64
    %325 = vmatpush.msra.mxu0 %v62
    %326 = vmatpush.msra.mxu0 %v60
    %327 = vmatpush.msra.mxu0 %v58
    %328 = vmatpush.msra.mxu0 %v56
    %329 = vmatpush.msra.mxu0 %v54
    %330 = vmatpush.msra.mxu0 %v52
    %331 = vmatmul.f32.gmra.mxu0 %v294
    %v332 = vpop.f32.mrf.mxu0
    %v333 = vadd.f32 %v40, %v332
    %334 = vdwg.mxu0
    %v335 = vxor.u32 %v313, 2147483648
    %v336 = vxor.u32 %v333, 2147483648
    %v337 = vmul.f32 %v335, 1.442695
    %v338 = vpow.pop %v337
    %v339 = vmul.f32 %v336, 1.442695
    %v340 = vpow.pop %v339
    %v341 = vadd.f32 %v338, 1.0
    %v342 = vadd.f32 %v340, 1.0
    %v343 = vrcp.pop %v341
    %v344 = vmul.f32 %v341, %v343
    %v345 = vsub.f32 1.0, %v344
    %v346 = vmul.f32 %v343, %v345
    %v347 = vadd.f32 %v343, %v346
    %vm348 = vweird.f32 %v341
    %vm349 = vweird.f32 %v343
    %vm350 = vmor %vm348, %vm349
    %v351 = vsel %vm350, %v343, %v347
    %v352 = vand.u32 2147483647, %v341
    %vm353 = vcmp.eq.f32.partialorder %v352, 8.507059e+37
    %v354 = vand.u32 %v341, 2147483648
    %v355 = vor.u32 1.1754944e-38, %v354
    %v356 = vsel %vm353, %v355, %v351
    %v357 = vmul.f32 1.0, %v356
    %v358 = vrcp.pop %v342
    %v359 = vmul.f32 %v342, %v358
    %v360 = vsub.f32 1.0, %v359
    %v361 = vmul.f32 %v358, %v360
    %v362 = vadd.f32 %v358, %v361
    %vm363 = vweird.f32 %v342
    %vm364 = vweird.f32 %v358
    %vm365 = vmor %vm363, %vm364
    %v366 = vsel %vm365, %v358, %v362
    %v367 = vand.u32 2147483647, %v342
    %vm368 = vcmp.eq.f32.partialorder %v367, 8.507059e+37
    %v369 = vand.u32 %v342, 2147483648
    %v370 = vor.u32 1.1754944e-38, %v369
    %v371 = vsel %vm368, %v370, %v366
    %v372 = vmul.f32 1.0, %v371
    %v373 = vtanh.pop %v313
    %v374 = vtanh.pop %v333
    %v375 = vsel %vm46, %v357, %v373
    %v376 = vsel %vm47, %v372, %v374
    %v377 = vmul.f32 %v375, %v281
    %379 = vrot.lane.b32.xlu0 %v376, 64
    %v380 = vpop.permute.xlu0 %379
    %v382 = vmul.f32 %v375, %v380
    %384 = vrot.lane.b32.xlu0 %v382, 64
    %v385 = vpop.permute.xlu0 %384
    %v387 = vadd.f32 %v377, %v385
    %v388 = vtanh.pop %v387
    %390 = vrot.lane.b32.xlu0 %v388, 64
    %v391 = vpop.permute.xlu0 %390
    %v393 = vmul.f32 %v376, %v391
    %s394 = scalar_lea.vmem %s0, 6
    %v395 = vld [vmem:[%s394] sm:$0x3]
    %397 = vrot.lane.b32.xlu0 %v393, 64
    %v398 = vpop.permute.xlu0 %397
    %v400 = vsel %vm49, %v395, %v398
    %401 = vmatpush.msra.mxu0 %v81
    %402 = vmatpush.msra.mxu0 %v79
    %403 = vmatpush.msra.mxu0 %v77
    %404 = vmatpush.msra.mxu0 %v75
    %405 = vmatpush.msra.mxu0 %v73
    %406 = vmatpush.msra.mxu0 %v71
    %407 = vmatpush.msra.mxu0 %v69
    %408 = vmatpush.msra.mxu0 %v67
    %409 = vmatpush.msra.mxu0 %v65
    %410 = vmatpush.msra.mxu0 %v63
    %411 = vmatpush.msra.mxu0 %v61
    %412 = vmatpush.msra.mxu0 %v59
    %413 = vmatpush.msra.mxu0 %v57
    %414 = vmatpush.msra.mxu0 %v55
    %415 = vmatpush.msra.mxu0 %v53
    %416 = vmatpush.msra.mxu0 %v51
    %417 = vmatmul.f32.gmra.mxu0 %v400
    %v418 = vpop.f32.mrf.mxu0
    %v419 = vadd.f32 %v39, %v418
    %420 = vdwg.mxu0
    %421 = vmatpush.msra.mxu0 %v82
    %422 = vmatpush.msra.mxu0 %v80
    %423 = vmatpush.msra.mxu0 %v78
    %424 = vmatpush.msra.mxu0 %v76
    %425 = vmatpush.msra.mxu0 %v74
    %426 = vmatpush.msra.mxu0 %v72
    %427 = vmatpush.msra.mxu0 %v70
    %428 = vmatpush.msra.mxu0 %v68
    %429 = vmatpush.msra.mxu0 %v66
    %430 = vmatpush.msra.mxu0 %v64
    %431 = vmatpush.msra.mxu0 %v62
    %432 = vmatpush.msra.mxu0 %v60
    %433 = vmatpush.msra.mxu0 %v58
    %434 = vmatpush.msra.mxu0 %v56
    %435 = vmatpush.msra.mxu0 %v54
    %436 = vmatpush.msra.mxu0 %v52
    %437 = vmatmul.f32.gmra.mxu0 %v400
    %v438 = vpop.f32.mrf.mxu0
    %v439 = vadd.f32 %v40, %v438
    %440 = vdwg.mxu0
    %v441 = vxor.u32 %v419, 2147483648
    %v442 = vxor.u32 %v439, 2147483648
    %v443 = vmul.f32 %v441, 1.442695
    %v444 = vpow.pop %v443
    %v445 = vmul.f32 %v442, 1.442695
    %v446 = vpow.pop %v445
    %v447 = vadd.f32 %v444, 1.0
    %v448 = vadd.f32 %v446, 1.0
    %v449 = vrcp.pop %v447
    %v450 = vmul.f32 %v447, %v449
    %v451 = vsub.f32 1.0, %v450
    %v452 = vmul.f32 %v449, %v451
    %v453 = vadd.f32 %v449, %v452
    %vm454 = vweird.f32 %v447
    %vm455 = vweird.f32 %v449
    %vm456 = vmor %vm454, %vm455
    %v457 = vsel %vm456, %v449, %v453
    %v458 = vand.u32 2147483647, %v447
    %vm459 = vcmp.eq.f32.partialorder %v458, 8.507059e+37
    %v460 = vand.u32 %v447, 2147483648
    %v461 = vor.u32 1.1754944e-38, %v460
    %v462 = vsel %vm459, %v461, %v457
    %v463 = vmul.f32 1.0, %v462
    %v464 = vrcp.pop %v448
    %v465 = vmul.f32 %v448, %v464
    %v466 = vsub.f32 1.0, %v465
    %v467 = vmul.f32 %v464, %v466
    %v468 = vadd.f32 %v464, %v467
    %vm469 = vweird.f32 %v448
    %vm470 = vweird.f32 %v464
    %vm471 = vmor %vm469, %vm470
    %v472 = vsel %vm471, %v464, %v468
    %v473 = vand.u32 2147483647, %v448
    %vm474 = vcmp.eq.f32.partialorder %v473, 8.507059e+37
    %v475 = vand.u32 %v448, 2147483648
    %v476 = vor.u32 1.1754944e-38, %v475
    %v477 = vsel %vm474, %v476, %v472
    %v478 = vmul.f32 1.0, %v477
    %v479 = vtanh.pop %v419
    %v480 = vtanh.pop %v439
    %v481 = vsel %vm46, %v463, %v479
    %v482 = vsel %vm47, %v478, %v480
    %v483 = vmul.f32 %v481, %v387
    %485 = vrot.lane.b32.xlu0 %v482, 64
    %v486 = vpop.permute.xlu0 %485
    %v488 = vmul.f32 %v481, %v486
    %490 = vrot.lane.b32.xlu0 %v488, 64
    %v491 = vpop.permute.xlu0 %490
    %v493 = vadd.f32 %v483, %v491
    %v494 = vtanh.pop %v493
    %496 = vrot.lane.b32.xlu0 %v494, 64
    %v497 = vpop.permute.xlu0 %496
    %v499 = vmul.f32 %v482, %v497
    %s500 = scalar_lea.vmem %s0, 8
    %v501 = vld [vmem:[%s500] sm:$0x3]
    %503 = vrot.lane.b32.xlu0 %v499, 64
    %v504 = vpop.permute.xlu0 %503
    %v506 = vsel %vm49, %v501, %v504
    %507 = vmatpush.msra.mxu0 %v81
    %508 = vmatpush.msra.mxu0 %v79
    %509 = vmatpush.msra.mxu0 %v77
    %510 = vmatpush.msra.mxu0 %v75
    %511 = vmatpush.msra.mxu0 %v73
    %512 = vmatpush.msra.mxu0 %v71
    %513 = vmatpush.msra.mxu0 %v69
    %514 = vmatpush.msra.mxu0 %v67
    %515 = vmatpush.msra.mxu0 %v65
    %516 = vmatpush.msra.mxu0 %v63
    %517 = vmatpush.msra.mxu0 %v61
    %518 = vmatpush.msra.mxu0 %v59
    %519 = vmatpush.msra.mxu0 %v57
    %520 = vmatpush.msra.mxu0 %v55
    %521 = vmatpush.msra.mxu0 %v53
    %522 = vmatpush.msra.mxu0 %v51
    %523 = vmatmul.f32.gmra.mxu0 %v506
    %v524 = vpop.f32.mrf.mxu0
    %v525 = vadd.f32 %v39, %v524
    %526 = vdwg.mxu0
    %527 = vmatpush.msra.mxu0 %v82
    %528 = vmatpush.msra.mxu0 %v80
    %529 = vmatpush.msra.mxu0 %v78
    %530 = vmatpush.msra.mxu0 %v76
    %531 = vmatpush.msra.mxu0 %v74
    %532 = vmatpush.msra.mxu0 %v72
    %533 = vmatpush.msra.mxu0 %v70
    %534 = vmatpush.msra.mxu0 %v68
    %535 = vmatpush.msra.mxu0 %v66
    %536 = vmatpush.msra.mxu0 %v64
    %537 = vmatpush.msra.mxu0 %v62
    %538 = vmatpush.msra.mxu0 %v60
    %539 = vmatpush.msra.mxu0 %v58
    %540 = vmatpush.msra.mxu0 %v56
    %541 = vmatpush.msra.mxu0 %v54
    %542 = vmatpush.msra.mxu0 %v52
    %543 = vmatmul.f32.gmra.mxu0 %v506
    %v544 = vpop.f32.mrf.mxu0
    %v545 = vadd.f32 %v40, %v544
    %546 = vdwg.mxu0
    %v547 = vxor.u32 %v525, 2147483648
    %v548 = vxor.u32 %v545, 2147483648
    %v549 = vmul.f32 %v547, 1.442695
    %v550 = vpow.pop %v549
    %v551 = vmul.f32 %v548, 1.442695
    %v552 = vpow.pop %v551
    %v553 = vadd.f32 %v550, 1.0
    %v554 = vadd.f32 %v552, 1.0
    %v555 = vrcp.pop %v553
    %v556 = vmul.f32 %v553, %v555
    %v557 = vsub.f32 1.0, %v556
    %v558 = vmul.f32 %v555, %v557
    %v559 = vadd.f32 %v555, %v558
    %vm560 = vweird.f32 %v553
    %vm561 = vweird.f32 %v555
    %vm562 = vmor %vm560, %vm561
    %v563 = vsel %vm562, %v555, %v559
    %v564 = vand.u32 2147483647, %v553
    %vm565 = vcmp.eq.f32.partialorder %v564, 8.507059e+37
    %v566 = vand.u32 %v553, 2147483648
    %v567 = vor.u32 1.1754944e-38, %v566
    %v568 = vsel %vm565, %v567, %v563
    %v569 = vmul.f32 1.0, %v568
    %v570 = vrcp.pop %v554
    %v571 = vmul.f32 %v554, %v570
    %v572 = vsub.f32 1.0, %v571
    %v573 = vmul.f32 %v570, %v572
    %v574 = vadd.f32 %v570, %v573
    %vm575 = vweird.f32 %v554
    %vm576 = vweird.f32 %v570
    %vm577 = vmor %vm575, %vm576
    %v578 = vsel %vm577, %v570, %v574
    %v579 = vand.u32 2147483647, %v554
    %vm580 = vcmp.eq.f32.partialorder %v579, 8.507059e+37
    %v581 = vand.u32 %v554, 2147483648
    %v582 = vor.u32 1.1754944e-38, %v581
    %v583 = vsel %vm580, %v582, %v578
    %v584 = vmul.f32 1.0, %v583
    %v585 = vtanh.pop %v525
    %v586 = vtanh.pop %v545
    %v587 = vsel %vm46, %v569, %v585
    %v588 = vsel %vm47, %v584, %v586
    %v589 = vmul.f32 %v587, %v493
    %591 = vrot.lane.b32.xlu0 %v588, 64
    %v592 = vpop.permute.xlu0 %591
    %v594 = vmul.f32 %v587, %v592
    %596 = vrot.lane.b32.xlu0 %v594, 64
    %v597 = vpop.permute.xlu0 %596
    %v599 = vadd.f32 %v589, %v597
    %v600 = vtanh.pop %v599
    %602 = vrot.lane.b32.xlu0 %v600, 64
    %v603 = vpop.permute.xlu0 %602
    %v605 = vmul.f32 %v588, %v603
    %s606 = scalar_lea.vmem %s0, 10
    %v607 = vld [vmem:[%s606] sm:$0x3]
    %609 = vrot.lane.b32.xlu0 %v605, 64
    %v610 = vpop.permute.xlu0 %609
    %v612 = vsel %vm49, %v607, %v610
    %613 = vmatpush.msra.mxu0 %v81
    %614 = vmatpush.msra.mxu0 %v79
    %615 = vmatpush.msra.mxu0 %v77
    %616 = vmatpush.msra.mxu0 %v75
    %617 = vmatpush.msra.mxu0 %v73
    %618 = vmatpush.msra.mxu0 %v71
    %619 = vmatpush.msra.mxu0 %v69
    %620 = vmatpush.msra.mxu0 %v67
    %621 = vmatpush.msra.mxu0 %v65
    %622 = vmatpush.msra.mxu0 %v63
    %623 = vmatpush.msra.mxu0 %v61
    %624 = vmatpush.msra.mxu0 %v59
    %625 = vmatpush.msra.mxu0 %v57
    %626 = vmatpush.msra.mxu0 %v55
    %627 = vmatpush.msra.mxu0 %v53
    %628 = vmatpush.msra.mxu0 %v51
    %629 = vmatmul.f32.gmra.mxu0 %v612
    %v630 = vpop.f32.mrf.mxu0
    %v631 = vadd.f32 %v39, %v630
    %632 = vdwg.mxu0
    %633 = vmatpush.msra.mxu0 %v82
    %634 = vmatpush.msra.mxu0 %v80
    %635 = vmatpush.msra.mxu0 %v78
    %636 = vmatpush.msra.mxu0 %v76
    %637 = vmatpush.msra.mxu0 %v74
    %638 = vmatpush.msra.mxu0 %v72
    %639 = vmatpush.msra.mxu0 %v70
    %640 = vmatpush.msra.mxu0 %v68
    %641 = vmatpush.msra.mxu0 %v66
    %642 = vmatpush.msra.mxu0 %v64
    %643 = vmatpush.msra.mxu0 %v62
    %644 = vmatpush.msra.mxu0 %v60
    %645 = vmatpush.msra.mxu0 %v58
    %646 = vmatpush.msra.mxu0 %v56
    %647 = vmatpush.msra.mxu0 %v54
    %648 = vmatpush.msra.mxu0 %v52
    %649 = vmatmul.f32.gmra.mxu0 %v612
    %v650 = vpop.f32.mrf.mxu0
    %v651 = vadd.f32 %v40, %v650
    %652 = vdwg.mxu0
    %v653 = vxor.u32 %v631, 2147483648
    %v654 = vxor.u32 %v651, 2147483648
    %v655 = vmul.f32 %v653, 1.442695
    %v656 = vpow.pop %v655
    %v657 = vmul.f32 %v654, 1.442695
    %v658 = vpow.pop %v657
    %v659 = vadd.f32 %v656, 1.0
    %v660 = vadd.f32 %v658, 1.0
    %v661 = vrcp.pop %v659
    %v662 = vmul.f32 %v659, %v661
    %v663 = vsub.f32 1.0, %v662
    %v664 = vmul.f32 %v661, %v663
    %v665 = vadd.f32 %v661, %v664
    %vm666 = vweird.f32 %v659
    %vm667 = vweird.f32 %v661
    %vm668 = vmor %vm666, %vm667
    %v669 = vsel %vm668, %v661, %v665
    %v670 = vand.u32 2147483647, %v659
    %vm671 = vcmp.eq.f32.partialorder %v670, 8.507059e+37
    %v672 = vand.u32 %v659, 2147483648
    %v673 = vor.u32 1.1754944e-38, %v672
    %v674 = vsel %vm671, %v673, %v669
    %v675 = vmul.f32 1.0, %v674
    %v676 = vrcp.pop %v660
    %v677 = vmul.f32 %v660, %v676
    %v678 = vsub.f32 1.0, %v677
    %v679 = vmul.f32 %v676, %v678
    %v680 = vadd.f32 %v676, %v679
    %vm681 = vweird.f32 %v660
    %vm682 = vweird.f32 %v676
    %vm683 = vmor %vm681, %vm682
    %v684 = vsel %vm683, %v676, %v680
    %v685 = vand.u32 2147483647, %v660
    %vm686 = vcmp.eq.f32.partialorder %v685, 8.507059e+37
    %v687 = vand.u32 %v660, 2147483648
    %v688 = vor.u32 1.1754944e-38, %v687
    %v689 = vsel %vm686, %v688, %v684
    %v690 = vmul.f32 1.0, %v689
    %v691 = vtanh.pop %v631
    %v692 = vtanh.pop %v651
    %v693 = vsel %vm46, %v675, %v691
    %v694 = vsel %vm47, %v690, %v692
    %v695 = vmul.f32 %v693, %v599
    %697 = vrot.lane.b32.xlu0 %v694, 64
    %v698 = vpop.permute.xlu0 %697
    %v700 = vmul.f32 %v693, %v698
    %702 = vrot.lane.b32.xlu0 %v700, 64
    %v703 = vpop.permute.xlu0 %702
    %v705 = vadd.f32 %v695, %v703
    %v706 = vtanh.pop %v705
    %708 = vrot.lane.b32.xlu0 %v706, 64
    %v709 = vpop.permute.xlu0 %708
    %v711 = vmul.f32 %v694, %v709
    %s712 = scalar_lea.vmem %s0, 12
    %v713 = vld [vmem:[%s712] sm:$0x3]
    %715 = vrot.lane.b32.xlu0 %v711, 64
    %v716 = vpop.permute.xlu0 %715
    %v718 = vsel %vm49, %v713, %v716
    %719 = vmatpush.msra.mxu0 %v81
    %720 = vmatpush.msra.mxu0 %v79
    %721 = vmatpush.msra.mxu0 %v77
    %722 = vmatpush.msra.mxu0 %v75
    %723 = vmatpush.msra.mxu0 %v73
    %724 = vmatpush.msra.mxu0 %v71
    %725 = vmatpush.msra.mxu0 %v69
    %726 = vmatpush.msra.mxu0 %v67
    %727 = vmatpush.msra.mxu0 %v65
    %728 = vmatpush.msra.mxu0 %v63
    %729 = vmatpush.msra.mxu0 %v61
    %730 = vmatpush.msra.mxu0 %v59
    %731 = vmatpush.msra.mxu0 %v57
    %732 = vmatpush.msra.mxu0 %v55
    %733 = vmatpush.msra.mxu0 %v53
    %734 = vmatpush.msra.mxu0 %v51
    %735 = vmatmul.f32.gmra.mxu0 %v718
    %v736 = vpop.f32.mrf.mxu0
    %v737 = vadd.f32 %v39, %v736
    %738 = vdwg.mxu0
    %739 = vmatpush.msra.mxu0 %v82
    %740 = vmatpush.msra.mxu0 %v80
    %741 = vmatpush.msra.mxu0 %v78
    %742 = vmatpush.msra.mxu0 %v76
    %743 = vmatpush.msra.mxu0 %v74
    %744 = vmatpush.msra.mxu0 %v72
    %745 = vmatpush.msra.mxu0 %v70
    %746 = vmatpush.msra.mxu0 %v68
    %747 = vmatpush.msra.mxu0 %v66
    %748 = vmatpush.msra.mxu0 %v64
    %749 = vmatpush.msra.mxu0 %v62
    %750 = vmatpush.msra.mxu0 %v60
    %751 = vmatpush.msra.mxu0 %v58
    %752 = vmatpush.msra.mxu0 %v56
    %753 = vmatpush.msra.mxu0 %v54
    %754 = vmatpush.msra.mxu0 %v52
    %755 = vmatmul.f32.gmra.mxu0 %v718
    %v756 = vpop.f32.mrf.mxu0
    %v757 = vadd.f32 %v40, %v756
    %758 = vdwg.mxu0
    %v759 = vxor.u32 %v737, 2147483648
    %v760 = vxor.u32 %v757, 2147483648
    %v761 = vmul.f32 %v759, 1.442695
    %v762 = vpow.pop %v761
    %v763 = vmul.f32 %v760, 1.442695
    %v764 = vpow.pop %v763
    %v765 = vadd.f32 %v762, 1.0
    %v766 = vadd.f32 %v764, 1.0
    %v767 = vrcp.pop %v765
    %v768 = vmul.f32 %v765, %v767
    %v769 = vsub.f32 1.0, %v768
    %v770 = vmul.f32 %v767, %v769
    %v771 = vadd.f32 %v767, %v770
    %vm772 = vweird.f32 %v765
    %vm773 = vweird.f32 %v767
    %vm774 = vmor %vm772, %vm773
    %v775 = vsel %vm774, %v767, %v771
    %v776 = vand.u32 2147483647, %v765
    %vm777 = vcmp.eq.f32.partialorder %v776, 8.507059e+37
    %v778 = vand.u32 %v765, 2147483648
    %v779 = vor.u32 1.1754944e-38, %v778
    %v780 = vsel %vm777, %v779, %v775
    %v781 = vmul.f32 1.0, %v780
    %v782 = vrcp.pop %v766
    %v783 = vmul.f32 %v766, %v782
    %v784 = vsub.f32 1.0, %v783
    %v785 = vmul.f32 %v782, %v784
    %v786 = vadd.f32 %v782, %v785
    %vm787 = vweird.f32 %v766
    %vm788 = vweird.f32 %v782
    %vm789 = vmor %vm787, %vm788
    %v790 = vsel %vm789, %v782, %v786
    %v791 = vand.u32 2147483647, %v766
    %vm792 = vcmp.eq.f32.partialorder %v791, 8.507059e+37
    %v793 = vand.u32 %v766, 2147483648
    %v794 = vor.u32 1.1754944e-38, %v793
    %v795 = vsel %vm792, %v794, %v790
    %v796 = vmul.f32 1.0, %v795
    %v797 = vtanh.pop %v737
    %v798 = vtanh.pop %v757
    %v799 = vsel %vm46, %v781, %v797
    %v800 = vsel %vm47, %v796, %v798
    %v801 = vmul.f32 %v799, %v705
    %803 = vrot.lane.b32.xlu0 %v800, 64
    %v804 = vpop.permute.xlu0 %803
    %v806 = vmul.f32 %v799, %v804
    %808 = vrot.lane.b32.xlu0 %v806, 64
    %v809 = vpop.permute.xlu0 %808
    %v811 = vadd.f32 %v801, %v809
    %v812 = vtanh.pop %v811
    %814 = vrot.lane.b32.xlu0 %v812, 64
    %v815 = vpop.permute.xlu0 %814
    %v817 = vmul.f32 %v800, %v815
    %s818 = scalar_lea.vmem %s0, 14
    %v819 = vld [vmem:[%s818] sm:$0x3]
    %821 = vrot.lane.b32.xlu0 %v817, 64
    %v822 = vpop.permute.xlu0 %821
    %v824 = vsel %vm49, %v819, %v822
    %825 = vmatpush.msra.mxu0 %v81
    %826 = vmatpush.msra.mxu0 %v79
    %827 = vmatpush.msra.mxu0 %v77
    %828 = vmatpush.msra.mxu0 %v75
    %829 = vmatpush.msra.mxu0 %v73
    %830 = vmatpush.msra.mxu0 %v71
    %831 = vmatpush.msra.mxu0 %v69
    %832 = vmatpush.msra.mxu0 %v67
    %833 = vmatpush.msra.mxu0 %v65
    %834 = vmatpush.msra.mxu0 %v63
    %835 = vmatpush.msra.mxu0 %v61
    %836 = vmatpush.msra.mxu0 %v59
    %837 = vmatpush.msra.mxu0 %v57
    %838 = vmatpush.msra.mxu0 %v55
    %839 = vmatpush.msra.mxu0 %v53
    %840 = vmatpush.msra.mxu0 %v51
    %841 = vmatmul.f32.gmra.mxu0 %v824
    %v842 = vpop.f32.mrf.mxu0
    %v843 = vadd.f32 %v39, %v842
    %844 = vdwg.mxu0
    %845 = vmatpush.msra.mxu0 %v82
    %846 = vmatpush.msra.mxu0 %v80
    %847 = vmatpush.msra.mxu0 %v78
    %848 = vmatpush.msra.mxu0 %v76
    %849 = vmatpush.msra.mxu0 %v74
    %850 = vmatpush.msra.mxu0 %v72
    %851 = vmatpush.msra.mxu0 %v70
    %852 = vmatpush.msra.mxu0 %v68
    %853 = vmatpush.msra.mxu0 %v66
    %854 = vmatpush.msra.mxu0 %v64
    %855 = vmatpush.msra.mxu0 %v62
    %856 = vmatpush.msra.mxu0 %v60
    %857 = vmatpush.msra.mxu0 %v58
    %858 = vmatpush.msra.mxu0 %v56
    %859 = vmatpush.msra.mxu0 %v54
    %860 = vmatpush.msra.mxu0 %v52
    %861 = vmatmul.f32.gmra.mxu0 %v824
    %v862 = vpop.f32.mrf.mxu0
    %v863 = vadd.f32 %v40, %v862
    %864 = vdwg.mxu0
    %v865 = vxor.u32 %v843, 2147483648
    %v866 = vxor.u32 %v863, 2147483648
    %v867 = vmul.f32 %v865, 1.442695
    %v868 = vpow.pop %v867
    %v869 = vmul.f32 %v866, 1.442695
    %v870 = vpow.pop %v869
    %v871 = vadd.f32 %v868, 1.0
    %v872 = vadd.f32 %v870, 1.0
    %v873 = vrcp.pop %v871
    %v874 = vmul.f32 %v871, %v873
    %v875 = vsub.f32 1.0, %v874
    %v876 = vmul.f32 %v873, %v875
    %v877 = vadd.f32 %v873, %v876
    %vm878 = vweird.f32 %v871
    %vm879 = vweird.f32 %v873
    %vm880 = vmor %vm878, %vm879
    %v881 = vsel %vm880, %v873, %v877
    %v882 = vand.u32 2147483647, %v871
    %vm883 = vcmp.eq.f32.partialorder %v882, 8.507059e+37
    %v884 = vand.u32 %v871, 2147483648
    %v885 = vor.u32 1.1754944e-38, %v884
    %v886 = vsel %vm883, %v885, %v881
    %v887 = vmul.f32 1.0, %v886
    %v888 = vrcp.pop %v872
    %v889 = vmul.f32 %v872, %v888
    %v890 = vsub.f32 1.0, %v889
    %v891 = vmul.f32 %v888, %v890
    %v892 = vadd.f32 %v888, %v891
    %vm893 = vweird.f32 %v872
    %vm894 = vweird.f32 %v888
    %vm895 = vmor %vm893, %vm894
    %v896 = vsel %vm895, %v888, %v892
    %v897 = vand.u32 2147483647, %v872
    %vm898 = vcmp.eq.f32.partialorder %v897, 8.507059e+37
    %v899 = vand.u32 %v872, 2147483648
    %v900 = vor.u32 1.1754944e-38, %v899
    %v901 = vsel %vm898, %v900, %v896
    %v902 = vmul.f32 1.0, %v901
    %v903 = vtanh.pop %v843
    %v904 = vtanh.pop %v863
    %v905 = vsel %vm46, %v887, %v903
    %v906 = vsel %vm47, %v902, %v904
    %v907 = vmul.f32 %v905, %v811
    %909 = vrot.lane.b32.xlu0 %v906, 64
    %v910 = vpop.permute.xlu0 %909
    %v912 = vmul.f32 %v905, %v910
    %914 = vrot.lane.b32.xlu0 %v912, 64
    %v915 = vpop.permute.xlu0 %914
    %v917 = vadd.f32 %v907, %v915
    %v918 = vtanh.pop %v917
    %920 = vrot.lane.b32.xlu0 %v918, 64
    %v921 = vpop.permute.xlu0 %920
    %v923 = vmul.f32 %v906, %v921
    %v924 = vld [vmem:[%s3] sm:$0xff]
    %v925 = vld [vmem:[%s3 + $0x8] sm:$0xff]
    %v926 = vld [vmem:[%s3 + $0x10] sm:$0xff]
    %v927 = vld [vmem:[%s3 + $0x18] sm:$0xff]
    %v928 = vld [vmem:[%s3 + $0x20] sm:$0xff]
    %v929 = vld [vmem:[%s3 + $0x28] sm:$0xff]
    %v930 = vld [vmem:[%s3 + $0x30] sm:$0xff]
    %v931 = vld [vmem:[%s3 + $0x38] sm:$0xff]
    %v932 = vld [vmem:[%s4] sm:$0x1]
    %v934 = vperm.slane %v932, 0
    %v937 = vsel %vm49, %v923, 0
    %939 = vmatpush.msra.mxu0 0.0
    %940 = vmatpush.msra.mxu0 0.0
    %941 = vmatpush.msra.mxu0 0.0
    %942 = vmatpush.msra.mxu0 0.0
    %943 = vmatpush.msra.mxu0 0.0
    %944 = vmatpush.msra.mxu0 0.0
    %945 = vmatpush.msra.mxu0 0.0
    %946 = vmatpush.msra.mxu0 0.0
    %947 = vmatpush.msra.mxu0 %v931
    %948 = vmatpush.msra.mxu0 %v930
    %949 = vmatpush.msra.mxu0 %v929
    %950 = vmatpush.msra.mxu0 %v928
    %951 = vmatpush.msra.mxu0 %v927
    %952 = vmatpush.msra.mxu0 %v926
    %953 = vmatpush.msra.mxu0 %v925
    %954 = vmatpush.msra.mxu0 %v924
    %955 = vmatmul.f32.gmra.mxu0 %v937
    %v956 = vpop.f32.mrf.mxu0
    %v957 = vadd.f32 %v934, %v956
    %958 = vdwg.mxu0
    %vm959 = vcmask 74752
    %960 = vst.msk [vmem:[#allocation5] sm:$0x3] %vm959, %v957
    // Predicated region
    $region26: #{tpu_custom_call.1} parent=1 // pred_check
      _
    $region27: #{tpu_custom_call.1} parent=1 // pred_check_branch
      %962 = sbr.rel (0) target = $region29
    $region28: #{tpu_custom_call.1} parent=1 // pred_region
      %964 = vsyncadd [#allocation4], 0
      %s966 = sshll.u32 [#allocation5], 4
      %s967 = int_to_ptr.vmem [resolvable:$true] %s966
      %s968 = sshll.u32 %s5, 4
      %s969 = int_to_ptr.hbm [resolvable:$true] %s968
      %971 = dma.vmem_to_hbm [thread:$0]  %s967, 32, %s969, [#allocation4]
    $region29: #{tpu_custom_call.1} parent=1 // pred_fallthru
      _
    // Predicated region
    $region30: #{tpu_custom_call.1} parent=1 // pred_check
      _
    $region31: #{tpu_custom_call.1} parent=1 // pred_check_branch
      %973 = sbr.rel (0) target = $region33
    $region32: #{tpu_custom_call.1} parent=1 // pred_region
      %975 = dma.done [#allocation4], 32
    $region33: #{tpu_custom_call.1} parent=1 // pred_fallthru
      _
    %976 = vsyncpa [#allocation3], 1
    %977 = vsyncpa [#allocation4], 1

</llo_original>
